<compile_context>
chip_gen: v6e
topology: v6e:2x2x1
jax: 0.10.0
libtpu: 0.0.40
codegen_flags: <defaults>
</compile_context>

<pallas_src>
import numpy as np
import jax
import jax.numpy as jnp
from jax.experimental import pallas as pl
from jax.experimental.pallas import tpu as pltpu

N_QUBITS = 4
N_LAYERS = 2
DIM = 1 << N_QUBITS          # 16
LANE = 128                   # TPU lane width; batch sits on the lane axis
MAX_TILE_B = 512             # default lane tile (sweep 512-2048 at scale)
BATCH = 8                    # demo batch


# ----------------------------------------------------------------------------
# Host glue: dense circuit unitary from the trainable weights, PauliZ table,
# and the per-qubit bit table.  Pure one-time parameter setup in numpy.
# ----------------------------------------------------------------------------
def _ry(theta):
    c, s = np.cos(theta / 2.0), np.sin(theta / 2.0)
    return np.array([[c, -s], [s, c]], dtype=np.float64)


def _single_qubit_op(gate2, wire, n):
    # wire 0 is the most significant bit (PennyLane convention)
    op = np.array([[1.0]], dtype=np.float64)
    for w in range(n):
        op = np.kron(op, gate2 if w == wire else np.eye(2))
    return op


def _cnot(control, target, n):
    dim = 1 << n
    m = np.zeros((dim, dim), dtype=np.float64)
    for s in range(dim):
        cbit = (s >> (n - 1 - control)) & 1
        t = s ^ (1 << (n - 1 - target)) if cbit else s
        m[t, s] = 1.0
    return m


def build_circuit_unitary(weights):
    """weights: (n_layers, n_qubits) -> dense (DIM, DIM) real unitary W."""
    w = np.asarray(weights, dtype=np.float64)
    U = np.eye(DIM)
    for l in range(N_LAYERS):
        for q in range(N_QUBITS):                       # rotations first
            U = _single_qubit_op(_ry(w[l, q]), q, N_QUBITS) @ U
        for q in range(N_QUBITS):                       # ring of CNOTs
            U = _cnot(q, (q + 1) % N_QUBITS, N_QUBITS) @ U
    return U.astype(np.float32)


def build_pauli_z_table():
    """Z[i, s] = +1 if bit_i(s) == 0 else -1   (shape (N_QUBITS, DIM))."""
    z = np.zeros((N_QUBITS, DIM), dtype=np.float32)
    for i in range(N_QUBITS):
        for s in range(DIM):
            z[i, s] = 1.0 - 2.0 * ((s >> (N_QUBITS - 1 - i)) & 1)
    return z


def build_bit_table():
    """bitf[q, s] = float(bit_q(s))   (shape (N_QUBITS, DIM))."""
    b = np.zeros((N_QUBITS, DIM), dtype=np.float32)
    for q in range(N_QUBITS):
        for s in range(DIM):
            b[q, s] = float((s >> (N_QUBITS - 1 - q)) & 1)
    return b


def build_kernel_constants(weights):
    """Constant operands, laid out for the transposed (batch-on-lanes) kernel."""
    W = build_circuit_unitary(weights)                   # (DIM, DIM): psi = W @ emb
    Z = build_pauli_z_table()                            # (N_QUBITS, DIM): out = Z @ probs
    bitcol = np.ascontiguousarray(build_bit_table().T)   # (DIM, N_QUBITS)
    return jnp.asarray(W), jnp.asarray(bitcol), jnp.asarray(Z)


# ----------------------------------------------------------------------------
# Pallas kernel: embedding amplitudes -> state evolution -> expectations.
# All tensors are (states/qubits, batch) so batch is the lane axis.
# ----------------------------------------------------------------------------
def qgan_kernel(xt_ref, w_ref, bitcol_ref, z_ref, out_ref):
    xt = xt_ref[...]                       # (N_QUBITS, TILE_B) angles
    c = jnp.cos(0.5 * xt)                  # (N_QUBITS, TILE_B)
    s = jnp.sin(0.5 * xt)
    bitcol = bitcol_ref[...]               # (DIM, N_QUBITS) constant 0/1 floats

    # AngleEmbedding(RY) on |0...0>:
    #   emb[state, b] = prod_q (c[q, b] if bit_q(state)==0 else s[q, b])
    # q = 0 factor initializes emb directly (no jnp.ones + extra multiply).
    emb = c[0:1, :] + (s[0:1, :] - c[0:1, :]) * bitcol[:, 0:1]        # (DIM, TILE_B)
    for q in range(1, N_QUBITS):
        emb = emb * (c[q:q + 1, :]
                     + (s[q:q + 1, :] - c[q:q + 1, :]) * bitcol[:, q:q + 1])

    # variational layers: psi = W @ emb   (MXU N = TILE_B, fully lane-dense)
    psi = jnp.dot(w_ref[...], emb, preferred_element_type=jnp.float32)  # (DIM, TILE_B)

    # PauliZ expectations: out = Z @ (psi*psi), batch stays on lanes
    out_ref[...] = jnp.dot(z_ref[...], psi * psi,
                           preferred_element_type=jnp.float32)          # (N_QUBITS, TILE_B)


def _choose_tiling(b, max_tile=MAX_TILE_B):
    """Pad batch to a multiple of 128 lanes and pick a lane tile."""
    b_pad = -(-b // LANE) * LANE
    tile = min(max_tile, b_pad)
    # Prefer >= 2 grid steps when there is enough work (v7x megacore sharding).
    if b_pad // tile < 2 and b_pad >= 2 * LANE:
        tile = LANE * max(1, b_pad // (2 * LANE))
    b_pad = -(-b_pad // tile) * tile
    return b_pad, tile


def quantum_gan_forward(x, W, bitcol, Z, *, max_tile=MAX_TILE_B):
    """x: (batch, N_QUBITS) float32 angles -> (batch, N_QUBITS) expectations."""
    b = x.shape[0]
    b_pad, tile = _choose_tiling(b, max_tile)

    xt = x.T                                             # (N_QUBITS, b), batch on lanes
    if b_pad != b:
        xt = jnp.pad(xt, ((0, 0), (0, b_pad - b)))       # cos(0)=1 -> valid padded state

    grid = (b_pad // tile,)
    flops = b_pad * (2 * DIM * DIM + 2 * N_QUBITS * DIM + 4 * N_QUBITS * DIM)
    bytes_accessed = 4 * (N_QUBITS * b_pad * 2            # x in, out
                          + DIM * DIM + DIM * N_QUBITS + N_QUBITS * DIM)

    out_t = pl.pallas_call(
        qgan_kernel,
        out_shape=jax.ShapeDtypeStruct((N_QUBITS, b_pad), jnp.float32),
        grid=grid,
        in_specs=[
            pl.BlockSpec((N_QUBITS, tile), lambda i: (0, i)),   # x^T, lane-dense
            pl.BlockSpec((DIM, DIM), lambda i: (0, 0)),         # VMEM-resident W
            pl.BlockSpec((DIM, N_QUBITS), lambda i: (0, 0)),    # VMEM-resident bit table
            pl.BlockSpec((N_QUBITS, DIM), lambda i: (0, 0)),    # VMEM-resident Z
        ],
        out_specs=pl.BlockSpec((N_QUBITS, tile), lambda i: (0, i)),
        compiler_params=pltpu.CompilerParams(
            dimension_semantics=("parallel",)),                 # 2 TCs on v7x
        cost_estimate=pl.CostEstimate(
            flops=flops,
            transcendentals=2 * N_QUBITS * b_pad,
            bytes_accessed=bytes_accessed),
    )(xt, W, bitcol, Z)

    return out_t[:, :b].T                                # (batch, N_QUBITS)


# ----------------------------------------------------------------------------
# Pure-JAX reference for correctness checking.
# ----------------------------------------------------------------------------
def reference_forward(x, weights):
    W = jnp.asarray(build_circuit_unitary(np.asarray(weights)))
    Z = jnp.asarray(build_pauli_z_table())
    bits = jnp.asarray(build_bit_table())               # (N_QUBITS, DIM)
    c = jnp.cos(0.5 * x)[:, :, None]                    # (B, Q, 1)
    s = jnp.sin(0.5 * x)[:, :, None]
    factors = jnp.where(bits[None] == 0, c, s)          # (B, Q, DIM)
    emb = jnp.prod(factors, axis=1)                     # (B, DIM)
    psi = emb @ W.T
    return (psi * psi) @ Z.T


if __name__ == "__main__":
    key = jax.random.PRNGKey(0)
    kx, kw, kx2 = jax.random.split(key, 3)

    x = jax.random.uniform(kx, (BATCH, N_QUBITS), dtype=jnp.float32,
                           minval=0.0, maxval=2.0 * np.pi)
    weights = jax.random.uniform(kw, (N_LAYERS, N_QUBITS), dtype=jnp.float32,
                                 minval=0.0, maxval=2.0 * np.pi)

    W, bitcol, Z = build_kernel_constants(np.asarray(weights))

    # small-batch path (single grid step)
    out = quantum_gan_forward(x, W, bitcol, Z)
    out = jax.block_until_ready(out)

    assert out.shape == (BATCH, N_QUBITS)
    assert out.dtype == jnp.float32
    # PauliZ expectations must lie in [-1, 1]
    assert bool(jnp.all(jnp.abs(out) <= 1.0 + 1e-5))

    ref = reference_forward(x, weights)
    assert bool(jnp.allclose(out, ref, rtol=1e-4, atol=1e-5)), (
        f"max abs err {float(jnp.max(jnp.abs(out - ref)))}")

    # multi-tile path (exercises the grid / megacore split + batch padding)
    x2 = jax.random.uniform(kx2, (260, N_QUBITS), dtype=jnp.float32,
                            minval=0.0, maxval=2.0 * np.pi)
    out2 = jax.block_until_ready(quantum_gan_forward(x2, W, bitcol, Z))
    ref2 = reference_forward(x2, weights)
    assert out2.shape == (260, N_QUBITS)
    assert bool(jnp.allclose(out2, ref2, rtol=1e-4, atol=1e-5)), (
        f"max abs err {float(jnp.max(jnp.abs(out2 - ref2)))}")

    print("KERNEL_OK")
</pallas_src>

<mosaic_0001>
module attributes {stable_mosaic.version = 11 : i64} {
  func.func @qgan_kernel(%arg0: i32, %arg1: memref<4x128xf32, #tpu.memory_space<vmem>>, %arg2: memref<16x16xf32, #tpu.memory_space<vmem>>, %arg3: memref<16x4xf32, #tpu.memory_space<vmem>>, %arg4: memref<4x16xf32, #tpu.memory_space<vmem>>, %arg5: memref<4x128xf32, #tpu.memory_space<vmem>>) attributes {dimension_semantics = [#tpu.dimension_semantics<parallel>], iteration_bounds = array<i64: 1>, scalar_prefetch = 0 : i64, scratch_operands = 0 : i64, tpu.core_type = #tpu.core_type<tc>, window_params = [{transform_indices = @transform_0, window_bounds = array<i64: 4, 128>}, {pipeline_mode = #tpu.pipeline_mode<synchronous>, transform_indices = @transform_1, window_bounds = array<i64: 16, 16>}, {pipeline_mode = #tpu.pipeline_mode<synchronous>, transform_indices = @transform_2, window_bounds = array<i64: 16, 4>}, {pipeline_mode = #tpu.pipeline_mode<synchronous>, transform_indices = @transform_3, window_bounds = array<i64: 4, 16>}, {transform_indices = @transform_4, window_bounds = array<i64: 4, 128>}]} {
    %c0 = arith.constant 0 : index
    %c0_0 = arith.constant 0 : index
    %0 = vector.load %arg1[%c0, %c0_0] : memref<4x128xf32, #tpu.memory_space<vmem>>, vector<4x128xf32>
    %cst = arith.constant 5.000000e-01 : f32
    %1 = vector.broadcast %cst : f32 to vector<4x128xf32>
    %2 = arith.mulf %1, %0 : vector<4x128xf32>
    %3 = math.cos %2 : vector<4x128xf32>
    %cst_1 = arith.constant 5.000000e-01 : f32
    %4 = vector.broadcast %cst_1 : f32 to vector<4x128xf32>
    %5 = arith.mulf %4, %0 : vector<4x128xf32>
    %6 = math.sin %5 : vector<4x128xf32>
    %c0_2 = arith.constant 0 : index
    %c0_3 = arith.constant 0 : index
    %7 = vector.load %arg3[%c0_2, %c0_3] : memref<16x4xf32, #tpu.memory_space<vmem>>, vector<16x4xf32>
    %8 = vector.extract_strided_slice %3 {offsets = [0, 0], sizes = [1, 128], strides = [1, 1]} : vector<4x128xf32> to vector<1x128xf32>
    %9 = vector.extract_strided_slice %6 {offsets = [0, 0], sizes = [1, 128], strides = [1, 1]} : vector<4x128xf32> to vector<1x128xf32>
    %10 = vector.extract_strided_slice %3 {offsets = [0, 0], sizes = [1, 128], strides = [1, 1]} : vector<4x128xf32> to vector<1x128xf32>
    %11 = arith.subf %9, %10 : vector<1x128xf32>
    %12 = vector.extract_strided_slice %7 {offsets = [0, 0], sizes = [16, 1], strides = [1, 1]} : vector<16x4xf32> to vector<16x1xf32>
    %13 = vector.broadcast %11 : vector<1x128xf32> to vector<16x128xf32>
    %14 = vector.broadcast %12 : vector<16x1xf32> to vector<16x128xf32>
    %15 = arith.mulf %13, %14 : vector<16x128xf32>
    %16 = vector.broadcast %8 : vector<1x128xf32> to vector<16x128xf32>
    %17 = arith.addf %16, %15 : vector<16x128xf32>
    %18 = vector.extract_strided_slice %3 {offsets = [1, 0], sizes = [1, 128], strides = [1, 1]} : vector<4x128xf32> to vector<1x128xf32>
    %19 = vector.extract_strided_slice %6 {offsets = [1, 0], sizes = [1, 128], strides = [1, 1]} : vector<4x128xf32> to vector<1x128xf32>
    %20 = vector.extract_strided_slice %3 {offsets = [1, 0], sizes = [1, 128], strides = [1, 1]} : vector<4x128xf32> to vector<1x128xf32>
    %21 = arith.subf %19, %20 : vector<1x128xf32>
    %22 = vector.extract_strided_slice %7 {offsets = [0, 1], sizes = [16, 1], strides = [1, 1]} : vector<16x4xf32> to vector<16x1xf32>
    %23 = vector.broadcast %21 : vector<1x128xf32> to vector<16x128xf32>
    %24 = vector.broadcast %22 : vector<16x1xf32> to vector<16x128xf32>
    %25 = arith.mulf %23, %24 : vector<16x128xf32>
    %26 = vector.broadcast %18 : vector<1x128xf32> to vector<16x128xf32>
    %27 = arith.addf %26, %25 : vector<16x128xf32>
    %28 = arith.mulf %17, %27 : vector<16x128xf32>
    %29 = vector.extract_strided_slice %3 {offsets = [2, 0], sizes = [1, 128], strides = [1, 1]} : vector<4x128xf32> to vector<1x128xf32>
    %30 = vector.extract_strided_slice %6 {offsets = [2, 0], sizes = [1, 128], strides = [1, 1]} : vector<4x128xf32> to vector<1x128xf32>
    %31 = vector.extract_strided_slice %3 {offsets = [2, 0], sizes = [1, 128], strides = [1, 1]} : vector<4x128xf32> to vector<1x128xf32>
    %32 = arith.subf %30, %31 : vector<1x128xf32>
    %33 = vector.extract_strided_slice %7 {offsets = [0, 2], sizes = [16, 1], strides = [1, 1]} : vector<16x4xf32> to vector<16x1xf32>
    %34 = vector.broadcast %32 : vector<1x128xf32> to vector<16x128xf32>
    %35 = vector.broadcast %33 : vector<16x1xf32> to vector<16x128xf32>
    %36 = arith.mulf %34, %35 : vector<16x128xf32>
    %37 = vector.broadcast %29 : vector<1x128xf32> to vector<16x128xf32>
    %38 = arith.addf %37, %36 : vector<16x128xf32>
    %39 = arith.mulf %28, %38 : vector<16x128xf32>
    %40 = vector.extract_strided_slice %3 {offsets = [3, 0], sizes = [1, 128], strides = [1, 1]} : vector<4x128xf32> to vector<1x128xf32>
    %41 = vector.extract_strided_slice %6 {offsets = [3, 0], sizes = [1, 128], strides = [1, 1]} : vector<4x128xf32> to vector<1x128xf32>
    %42 = vector.extract_strided_slice %3 {offsets = [3, 0], sizes = [1, 128], strides = [1, 1]} : vector<4x128xf32> to vector<1x128xf32>
    %43 = arith.subf %41, %42 : vector<1x128xf32>
    %44 = vector.extract_strided_slice %7 {offsets = [0, 3], sizes = [16, 1], strides = [1, 1]} : vector<16x4xf32> to vector<16x1xf32>
    %45 = vector.broadcast %43 : vector<1x128xf32> to vector<16x128xf32>
    %46 = vector.broadcast %44 : vector<16x1xf32> to vector<16x128xf32>
    %47 = arith.mulf %45, %46 : vector<16x128xf32>
    %48 = vector.broadcast %40 : vector<1x128xf32> to vector<16x128xf32>
    %49 = arith.addf %48, %47 : vector<16x128xf32>
    %50 = arith.mulf %39, %49 : vector<16x128xf32>
    %c0_4 = arith.constant 0 : index
    %c0_5 = arith.constant 0 : index
    %51 = vector.load %arg2[%c0_4, %c0_5] : memref<16x16xf32, #tpu.memory_space<vmem>>, vector<16x16xf32>
    %cst_6 = arith.constant dense<0.000000e+00> : vector<16x128xf32>
    %52 = tpu.matmul %51, %50, %cst_6 {dimension_numbers = #tpu.dot_dimension_numbers<[1], [0], [0], [1], [0, 0, 1, 1], [], []>} : vector<16x16xf32>, vector<16x128xf32>, vector<16x128xf32> -> vector<16x128xf32>
    %c0_7 = arith.constant 0 : index
    %c0_8 = arith.constant 0 : index
    %53 = vector.load %arg4[%c0_7, %c0_8] : memref<4x16xf32, #tpu.memory_space<vmem>>, vector<4x16xf32>
    %54 = arith.mulf %52, %52 : vector<16x128xf32>
    %cst_9 = arith.constant dense<0.000000e+00> : vector<4x128xf32>
    %55 = tpu.matmul %53, %54, %cst_9 {dimension_numbers = #tpu.dot_dimension_numbers<[1], [0], [0], [1], [0, 0, 1, 1], [], []>} : vector<4x16xf32>, vector<16x128xf32>, vector<4x128xf32> -> vector<4x128xf32>
    %c0_10 = arith.constant 0 : index
    %c0_11 = arith.constant 0 : index
    %56 = vector.load %arg5[%c0_10, %c0_11] : memref<4x128xf32, #tpu.memory_space<vmem>>, vector<4x128xf32>
    tpu.vector_store %arg5[%c0_10, %c0_11], %55 {strides = array<i32>} : memref<4x128xf32, #tpu.memory_space<vmem>>, vector<4x128xf32>,
    return
  }
  func.func @transform_0(%arg0: i32) -> (i32, i32) {
    %c0_i32 = arith.constant 0 : i32
    %c0_i32_0 = arith.constant 0 : i32
    return %c0_i32, %arg0 : i32, i32
  }
  func.func @transform_1(%arg0: i32) -> (i32, i32) {
    %c0_i32 = arith.constant 0 : i32
    %c0_i32_0 = arith.constant 0 : i32
    %c0_i32_1 = arith.constant 0 : i32
    return %c0_i32, %c0_i32_0 : i32, i32
  }
  func.func @transform_2(%arg0: i32) -> (i32, i32) {
    %c0_i32 = arith.constant 0 : i32
    %c0_i32_0 = arith.constant 0 : i32
    %c0_i32_1 = arith.constant 0 : i32
    return %c0_i32, %c0_i32_0 : i32, i32
  }
  func.func @transform_3(%arg0: i32) -> (i32, i32) {
    %c0_i32 = arith.constant 0 : i32
    %c0_i32_0 = arith.constant 0 : i32
    %c0_i32_1 = arith.constant 0 : i32
    return %c0_i32, %c0_i32_0 : i32, i32
  }
  func.func @transform_4(%arg0: i32) -> (i32, i32) {
    %c0_i32 = arith.constant 0 : i32
    %c0_i32_0 = arith.constant 0 : i32
    return %c0_i32, %arg0 : i32, i32
  }
}

</mosaic_0001>

<llo_original>
// kernel: tpu_custom_call.1
$region0: #{tpu_custom_call.1}
  #allocation0 [shape = 'u32[]', space=smem, size = 0x4, offset = 0x4, fixed_abs, tag = 'smem constant byte address 0x4 - core index']
  #allocation1 [shape = 'u32[144,128]{1,0:T(1,128)}', space=vmem, size = 0x12000, scoped, tag = 'internal scratch']
  %s0 = inlined_call_operand.vmem [shape: f32[4,128], index: 0, kind: input, shape index: {}]
  %s1 = inlined_call_operand.vmem [shape: f32[16,16], index: 1, kind: input, shape index: {}]
  %s2 = inlined_call_operand.vmem [shape: f32[16,4], index: 2, kind: input, shape index: {}]
  %s3 = inlined_call_operand.vmem [shape: f32[4,16], index: 3, kind: input, shape index: {}]
  %s4 = inlined_call_operand.hbm [shape: f32[4,128], index: 4, kind: output, shape index: {}]
  %s5 = sld [smem:[#allocation0]]
  $region26: #{tpu_custom_call.1} parent=0
    _
  %s7 = ssub.s32 1, %s5
  %s8 = scalar_select 0, %s7, %s5
  $region1: #{tpu_custom_call.1} parent=0
    #allocation2 [shape = 'u8[2048]{0}', space=vmem, size = 0x800, scoped, tag = 'output window, operand 0, single buffered']
    #allocation3 [shape = 's32[1]{0}', space=sflag, size = 0x4, scoped, tag = 'scoped memory for tpu_custom_call.1']
    %9 = vsyncpa [#allocation3], 0
    // Predicated region
    $region2: #{tpu_custom_call.1} parent=1 // pred_check
      _
    $region3: #{tpu_custom_call.1} parent=1 // pred_check_branch
      %11 = sbr.rel (0) target = $region5
    $region4: #{tpu_custom_call.1} parent=1 // pred_region
      _
    $region5: #{tpu_custom_call.1} parent=1 // pred_fallthru
      _
    // Predicated region
    $region6: #{tpu_custom_call.1} parent=1 // pred_check
      _
    $region7: #{tpu_custom_call.1} parent=1 // pred_check_branch
      %13 = sbr.rel (0) target = $region9
    $region8: #{tpu_custom_call.1} parent=1 // pred_region
      _
    $region9: #{tpu_custom_call.1} parent=1 // pred_fallthru
      _
    // Predicated region
    $region10: #{tpu_custom_call.1} parent=1 // pred_check
      _
    $region11: #{tpu_custom_call.1} parent=1 // pred_check_branch
      %15 = sbr.rel (0) target = $region13
    $region12: #{tpu_custom_call.1} parent=1 // pred_region
      _
    $region13: #{tpu_custom_call.1} parent=1 // pred_fallthru
      _
    // Predicated region
    $region14: #{tpu_custom_call.1} parent=1 // pred_check
      _
    $region15: #{tpu_custom_call.1} parent=1 // pred_check_branch
      %17 = sbr.rel (0) target = $region17
    $region16: #{tpu_custom_call.1} parent=1 // pred_region
      _
    $region17: #{tpu_custom_call.1} parent=1 // pred_fallthru
      _
    %v18 = vld [vmem:[%s0] sm:$0xf]
    %v19 = vmul.f32 %v18, 0.5
    %v20 = vand.u32 2147483647, %v19
    %vm21 = vcmp.le.f32.partialorder %v20, 0.7853982
    %vm22 = vcmp.lt.s32.totalorder %v19, 0
    %v23 = vand.u32 %v19, 2139095040
    %v24 = vshrl.u32 %v23, 23
    %v25 = vsub.s32 %v24, 127
    %v26 = vand.u32 2147483647, %v19
    %v27 = vand.u32 %v26, 8388607
    %v28 = vor.u32 %v27, 8388608
    %v29 = vsub.s32 0, %v28
    %v30 = vadd.s32 %v25, 1
    %vm31 = vcmp.gt.s32.totalorder %v30, 0
    %v32 = vsel %vm31, %v30, 0
    %v33 = vshrl.u32 %v32, 5
    %v34 = vand.u32 %v32, 31
    %v35 = vsub.s32 32, %v34
    %v36 = vshrl.u32 683565275, %v35
    %v37 = vshll.u32 683565275, %v34
    %v38 = vshrl.u32 2475754826, %v35
    %v39 = vor.u32 %v37, %v38
    %v40 = vshll.u32 2475754826, %v34
    %v41 = vshrl.u32 2131351028, %v35
    %v42 = vor.u32 %v40, %v41
    %v43 = vshll.u32 2131351028, %v34
    %v44 = vshrl.u32 2102212464, %v35
    %v45 = vor.u32 %v43, %v44
    %v46 = vshll.u32 2102212464, %v34
    %v47 = vshrl.u32 920167782, %v35
    %v48 = vor.u32 %v46, %v47
    %v49 = vshll.u32 920167782, %v34
    %v50 = vshrl.u32 1326507024, %v35
    %v51 = vor.u32 %v49, %v50
    %vm52 = vcmp.lt.s32.totalorder %v33, 1
    %vm53 = vcmp.lt.s32.totalorder %v33, 2
    %vm54 = vcmp.lt.s32.totalorder %v33, 3
    %vm55 = vcmp.lt.s32.totalorder %v33, 4
    %v56 = vsel %vm52, %v36, %v39
    %v57 = vsel %vm55, %v45, 2102212464
    %v58 = vsel %vm54, %v42, %v57
    %v59 = vsel %vm53, %v56, %v58
    %v60 = vsel %vm52, %v39, %v42
    %v61 = vsel %vm55, %v48, 920167782
    %v62 = vsel %vm54, %v45, %v61
    %v63 = vsel %vm53, %v60, %v62
    %v64 = vsel %vm52, %v42, %v45
    %v65 = vsel %vm55, %v51, 1326507024
    %v66 = vsel %vm54, %v48, %v65
    %v67 = vsel %vm53, %v64, %v66
    %v68 = vshll.u32 %v28, 8
    %v69 = vmul.u32.u64.compose %v68, %v67
    %v70 = vextract.low.u32 %v69
    %v71 = vextract.high.u32 %v69
    %v72 = vmul.u32.u64.compose %v68, %v63
    %v73 = vextract.low.u32 %v72
    %v74 = vextract.high.u32 %v72
    %v75 = vmul.u32 %v68, %v59
    %v76 = vadd.s32 %v71, %v73
    %vm77 = vc.u32 %v71, %v73
    %v78 = vadd.s32 %v74, 1
    %v79 = vsel %vm77, %v78, %v74
    %v80 = vadd.s32 %v75, %v79
    %v81 = vadd.s32 %v80, 536870912
    %v82 = vshrl.u32 %v81, 30
    %v83 = vshll.u32 %v82, 30
    %v84 = vsub.s32 %v80, %v83
    %vm85 = vcmp.lt.s32.totalorder %v84, 0
    %v86 = vsub.s32 0, %v84
    %v87 = vsel %vm85, %v86, %v84
    %v88 = vclz %v87
    %v89 = vsub.s32 %v88, 2
    %vm90 = vcmp.gt.s32.totalorder 0, %v89
    %v91 = vsel %vm90, 0, %v89
    %v92 = vsub.s32 32, %v91
    %v93 = vshll.u32 %v84, %v91
    %v94 = vshrl.u32 %v76, %v92
    %v95 = vor.u32 %v93, %v94
    %v96 = vsub.s32 4294967266, %v91
    %v97 = vadd.s32 %v96, 127
    %v98 = vshll.u32 %v97, 23
    %v99 = vor.u32 4788187, %v98
    %v100 = vand.u32 2147483647, %v99
    %v102 = vcvt.s32.f32 %v95
    %v103 = vmul.f32 %v102, %v100
    %v104 = vxor.u32 %v103, 2147483648
    %v105 = vsel %vm22, %v104, %v103
    %v106 = vsub.s32 4, %v82
    %v107 = vsel %vm22, %v106, %v82
    %v108 = vsel %vm21, %v19, %v105
    %v109 = vsel %vm21, 0, %v107
    %v110 = vcosq.f32.pop %v108
    %v111 = vsinq.f32.pop %v108
    %vm112 = vweird.f32 %v19
    %v113 = vand.u32 %v109, 3
    %vm114 = vcmp.lt.s32.totalorder %v113, 2
    %vm115 = vcmp.eq.s32.totalorder %v113, 0
    %v116 = vxor.u32 %v111, 2147483648
    %v117 = vsel %vm115, %v110, %v116
    %vm118 = vcmp.eq.s32.totalorder %v113, 2
    %v119 = vxor.u32 %v110, 2147483648
    %v120 = vsel %vm118, %v119, %v111
    %v121 = vsel %vm114, %v117, %v120
    %v122 = vsel %vm112, nan, %v121
    %v123 = vand.u32 2147483647, %v19
    %vm124 = vcmp.le.f32.partialorder %v123, 0.7853982
    %vm125 = vcmp.lt.s32.totalorder %v19, 0
    %v126 = vand.u32 %v19, 2139095040
    %v127 = vshrl.u32 %v126, 23
    %v128 = vsub.s32 %v127, 127
    %v129 = vand.u32 2147483647, %v19
    %v130 = vand.u32 %v129, 8388607
    %v131 = vor.u32 %v130, 8388608
    %v132 = vsub.s32 0, %v131
    %v133 = vadd.s32 %v128, 1
    %vm134 = vcmp.gt.s32.totalorder %v133, 0
    %v135 = vsel %vm134, %v133, 0
    %v136 = vshrl.u32 %v135, 5
    %v137 = vand.u32 %v135, 31
    %v138 = vsub.s32 32, %v137
    %v139 = vshrl.u32 683565275, %v138
    %v140 = vshll.u32 683565275, %v137
    %v141 = vshrl.u32 2475754826, %v138
    %v142 = vor.u32 %v140, %v141
    %v143 = vshll.u32 2475754826, %v137
    %v144 = vshrl.u32 2131351028, %v138
    %v145 = vor.u32 %v143, %v144
    %v146 = vshll.u32 2131351028, %v137
    %v147 = vshrl.u32 2102212464, %v138
    %v148 = vor.u32 %v146, %v147
    %v149 = vshll.u32 2102212464, %v137
    %v150 = vshrl.u32 920167782, %v138
    %v151 = vor.u32 %v149, %v150
    %v152 = vshll.u32 920167782, %v137
    %v153 = vshrl.u32 1326507024, %v138
    %v154 = vor.u32 %v152, %v153
    %vm155 = vcmp.lt.s32.totalorder %v136, 1
    %vm156 = vcmp.lt.s32.totalorder %v136, 2
    %vm157 = vcmp.lt.s32.totalorder %v136, 3
    %vm158 = vcmp.lt.s32.totalorder %v136, 4
    %v159 = vsel %vm155, %v139, %v142
    %v160 = vsel %vm158, %v148, 2102212464
    %v161 = vsel %vm157, %v145, %v160
    %v162 = vsel %vm156, %v159, %v161
    %v163 = vsel %vm155, %v142, %v145
    %v164 = vsel %vm158, %v151, 920167782
    %v165 = vsel %vm157, %v148, %v164
    %v166 = vsel %vm156, %v163, %v165
    %v167 = vsel %vm155, %v145, %v148
    %v168 = vsel %vm158, %v154, 1326507024
    %v169 = vsel %vm157, %v151, %v168
    %v170 = vsel %vm156, %v167, %v169
    %v171 = vshll.u32 %v131, 8
    %v172 = vmul.u32.u64.compose %v171, %v170
    %v173 = vextract.low.u32 %v172
    %v174 = vextract.high.u32 %v172
    %v175 = vmul.u32.u64.compose %v171, %v166
    %v176 = vextract.low.u32 %v175
    %v177 = vextract.high.u32 %v175
    %v178 = vmul.u32 %v171, %v162
    %v179 = vadd.s32 %v174, %v176
    %vm180 = vc.u32 %v174, %v176
    %v181 = vadd.s32 %v177, 1
    %v182 = vsel %vm180, %v181, %v177
    %v183 = vadd.s32 %v178, %v182
    %v184 = vadd.s32 %v183, 536870912
    %v185 = vshrl.u32 %v184, 30
    %v186 = vshll.u32 %v185, 30
    %v187 = vsub.s32 %v183, %v186
    %vm188 = vcmp.lt.s32.totalorder %v187, 0
    %v189 = vsub.s32 0, %v187
    %v190 = vsel %vm188, %v189, %v187
    %v191 = vclz %v190
    %v192 = vsub.s32 %v191, 2
    %vm193 = vcmp.gt.s32.totalorder 0, %v192
    %v194 = vsel %vm193, 0, %v192
    %v195 = vsub.s32 32, %v194
    %v196 = vshll.u32 %v187, %v194
    %v197 = vshrl.u32 %v179, %v195
    %v198 = vor.u32 %v196, %v197
    %v199 = vsub.s32 4294967266, %v194
    %v200 = vadd.s32 %v199, 127
    %v201 = vshll.u32 %v200, 23
    %v202 = vor.u32 4788187, %v201
    %v203 = vand.u32 2147483647, %v202
    %v205 = vcvt.s32.f32 %v198
    %v206 = vmul.f32 %v205, %v203
    %v207 = vxor.u32 %v206, 2147483648
    %v208 = vsel %vm125, %v207, %v206
    %v209 = vsub.s32 4, %v185
    %v210 = vsel %vm125, %v209, %v185
    %v211 = vsel %vm124, %v19, %v208
    %v212 = vsel %vm124, 0, %v210
    %v213 = vcosq.f32.pop %v211
    %v214 = vsinq.f32.pop %v211
    %vm215 = vweird.f32 %v19
    %v216 = vadd.s32 %v212, 3
    %v217 = vand.u32 %v216, 3
    %vm218 = vcmp.lt.s32.totalorder %v217, 2
    %vm219 = vcmp.eq.s32.totalorder %v217, 0
    %v220 = vxor.u32 %v214, 2147483648
    %v221 = vsel %vm219, %v213, %v220
    %vm222 = vcmp.eq.s32.totalorder %v217, 2
    %v223 = vxor.u32 %v213, 2147483648
    %v224 = vsel %vm222, %v223, %v214
    %v225 = vsel %vm218, %v221, %v224
    %v226 = vsel %vm215, nan, %v225
    %v227 = vld [vmem:[%s2] sm:$0xff]
    %v228 = vld [vmem:[%s2 + $0x8] sm:$0xff]
    %v229 = vsub.f32 %v226, %v122
    %v230 = vlaneseq
    %v231 = vshrl.u32 %v230, 7
    %v232 = vsub.s32 0, %v231
    %v233 = vrot.slane %v229, %v232
    %235 = vset.pattern.permute.xlu0 0
    %236 = vperm.xlu0 %235, %v227
    %v237 = vpop.permute.xlu0 %236
    %240 = vset.pattern.permute.xlu0 0
    %241 = vperm.xlu0 %240, %v228
    %v242 = vpop.permute.xlu0 %241
    %v244 = vmul.f32 %v233, %v237
    %v245 = vmul.f32 %v233, %v242
    %v246 = vlaneseq
    %v247 = vshrl.u32 %v246, 7
    %v248 = vsub.s32 0, %v247
    %v249 = vrot.slane %v122, %v248
    %v250 = vadd.f32 %v249, %v244
    %v251 = vadd.f32 %v249, %v245
    %v252 = vlaneseq
    %v253 = vshrl.u32 %v252, 7
    %v254 = vsub.s32 1, %v253
    %v255 = vrot.slane %v229, %v254
    %256 = vset.pattern.permute.xlu0 1
    %257 = vperm.xlu0 %256, %v227
    %v258 = vpop.permute.xlu0 %257
    %260 = vset.pattern.permute.xlu0 1
    %261 = vperm.xlu0 %260, %v228
    %v262 = vpop.permute.xlu0 %261
    %v264 = vmul.f32 %v255, %v258
    %v265 = vmul.f32 %v255, %v262
    %v266 = vlaneseq
    %v267 = vshrl.u32 %v266, 7
    %v268 = vsub.s32 1, %v267
    %v269 = vrot.slane %v122, %v268
    %v270 = vadd.f32 %v269, %v264
    %v271 = vadd.f32 %v269, %v265
    %v272 = vmul.f32 %v250, %v270
    %v273 = vmul.f32 %v251, %v271
    %v274 = vlaneseq
    %v275 = vshrl.u32 %v274, 7
    %v276 = vsub.s32 2, %v275
    %v277 = vrot.slane %v229, %v276
    %278 = vset.pattern.permute.xlu0 2
    %279 = vperm.xlu0 %278, %v227
    %v280 = vpop.permute.xlu0 %279
    %282 = vset.pattern.permute.xlu0 2
    %283 = vperm.xlu0 %282, %v228
    %v284 = vpop.permute.xlu0 %283
    %v286 = vmul.f32 %v277, %v280
    %v287 = vmul.f32 %v277, %v284
    %v288 = vlaneseq
    %v289 = vshrl.u32 %v288, 7
    %v290 = vsub.s32 2, %v289
    %v291 = vrot.slane %v122, %v290
    %v292 = vadd.f32 %v291, %v286
    %v293 = vadd.f32 %v291, %v287
    %v294 = vmul.f32 %v272, %v292
    %v295 = vmul.f32 %v273, %v293
    %v296 = vlaneseq
    %v297 = vshrl.u32 %v296, 7
    %v298 = vsub.s32 3, %v297
    %v299 = vrot.slane %v229, %v298
    %300 = vset.pattern.permute.xlu0 3
    %301 = vperm.xlu0 %300, %v227
    %v302 = vpop.permute.xlu0 %301
    %304 = vset.pattern.permute.xlu0 3
    %305 = vperm.xlu0 %304, %v228
    %v306 = vpop.permute.xlu0 %305
    %v308 = vmul.f32 %v299, %v302
    %v309 = vmul.f32 %v299, %v306
    %v310 = vlaneseq
    %v311 = vshrl.u32 %v310, 7
    %v312 = vsub.s32 3, %v311
    %v313 = vrot.slane %v122, %v312
    %v314 = vadd.f32 %v313, %v308
    %v315 = vadd.f32 %v313, %v309
    %v316 = vmul.f32 %v294, %v314
    %v317 = vmul.f32 %v295, %v315
    %v318 = vld [vmem:[%s1] sm:$0xff]
    %v319 = vld [vmem:[%s1 + $0x8] sm:$0xff]
    %vm320 = vcmask 130048
    %v322 = vsel %vm320, %v318, 0
    %v325 = vsel %vm320, %v319, 0
    %327 = vmatprep.subr.mxu0 0.0
    %328 = vmatpush1.msra.mxu0 0.0
    %329 = vmatprep.subr.mxu0 0.0
    %330 = vmatpush1.msra.mxu0 0.0
    %331 = vmatprep.subr.mxu0 0.0
    %332 = vmatpush1.msra.mxu0 0.0
    %333 = vmatprep.subr.mxu0 0.0
    %334 = vmatpush1.msra.mxu0 0.0
    %335 = vmatprep.subr.mxu0 0.0
    %336 = vmatpush1.msra.mxu0 0.0
    %337 = vmatprep.subr.mxu0 0.0
    %338 = vmatpush1.msra.mxu0 0.0
    %339 = vmatprep.subr.mxu0 0.0
    %340 = vmatpush1.msra.mxu0 0.0
    %341 = vmatprep.subr.mxu0 0.0
    %342 = vmatpush1.msra.mxu0 0.0
    %343 = vmatprep.subr.mxu0 0.0
    %344 = vmatpush1.msra.mxu0 0.0
    %345 = vmatprep.subr.mxu0 0.0
    %346 = vmatpush1.msra.mxu0 0.0
    %347 = vmatprep.subr.mxu0 0.0
    %348 = vmatpush1.msra.mxu0 0.0
    %349 = vmatprep.subr.mxu0 0.0
    %350 = vmatpush1.msra.mxu0 0.0
    %351 = vmatprep.subr.mxu0 0.0
    %352 = vmatpush1.msra.mxu0 0.0
    %353 = vmatprep.subr.mxu0 0.0
    %354 = vmatpush1.msra.mxu0 0.0
    %355 = vmatprep.subr.mxu0 0.0
    %356 = vmatpush1.msra.mxu0 %v317
    %357 = vmatprep.subr.mxu0 0.0
    %358 = vmatpush1.msra.mxu0 %v316
    %359 = vmatprep.subr.mxu0 0.0
    %360 = vmatpush2.msra.mxu0 0.0
    %361 = vmatprep.subr.mxu0 0.0
    %362 = vmatpush2.msra.mxu0 0.0
    %363 = vmatprep.subr.mxu0 0.0
    %364 = vmatpush2.msra.mxu0 0.0
    %365 = vmatprep.subr.mxu0 0.0
    %366 = vmatpush2.msra.mxu0 0.0
    %367 = vmatprep.subr.mxu0 0.0
    %368 = vmatpush2.msra.mxu0 0.0
    %369 = vmatprep.subr.mxu0 0.0
    %370 = vmatpush2.msra.mxu0 0.0
    %371 = vmatprep.subr.mxu0 0.0
    %372 = vmatpush2.msra.mxu0 0.0
    %373 = vmatprep.subr.mxu0 0.0
    %374 = vmatpush2.msra.mxu0 0.0
    %375 = vmatprep.subr.mxu0 0.0
    %376 = vmatpush2.msra.mxu0 0.0
    %377 = vmatprep.subr.mxu0 0.0
    %378 = vmatpush2.msra.mxu0 0.0
    %379 = vmatprep.subr.mxu0 0.0
    %380 = vmatpush2.msra.mxu0 0.0
    %381 = vmatprep.subr.mxu0 0.0
    %382 = vmatpush2.msra.mxu0 0.0
    %383 = vmatprep.subr.mxu0 0.0
    %384 = vmatpush2.msra.mxu0 0.0
    %385 = vmatprep.subr.mxu0 0.0
    %386 = vmatpush2.msra.mxu0 0.0
    %387 = vmatprep.subr.mxu0 0.0
    %388 = vmatpush2.msra.mxu0 0.0
    %389 = vmatprep.subr.mxu0 0.0
    %390 = vmatpush2.msra.mxu0 0.0
    %391 = vmatprep.mubr.f32.mxu0 0.0
    %392 = vmatmul.mubr.f32.gmra.mxu0 %v322
    %v393 = vpop.f32.mrf.mxu0
    %v394 = vadd.f32 0.0, %v393
    %v395 = vpop.f32.mrf.mxu0
    %396 = vmatprep.mubr.f32.mxu0 0.0
    %397 = vmatmul.mubr.f32.gmra.mxu0 %v325
    %v398 = vpop.f32.mrf.mxu0
    %v399 = vadd.f32 0.0, %v398
    %v400 = vpop.f32.mrf.mxu0
    %401 = vdwg.mxu0
    %v402 = vld [vmem:[%s3] sm:$0xf]
    %v403 = vmul.f32 %v394, %v394
    %v404 = vmul.f32 %v399, %v399
    %v406 = vsel %vm320, %v402, 0
    %408 = vmatprep.subr.mxu0 0.0
    %409 = vmatpush1.msra.mxu0 0.0
    %410 = vmatprep.subr.mxu0 0.0
    %411 = vmatpush1.msra.mxu0 0.0
    %412 = vmatprep.subr.mxu0 0.0
    %413 = vmatpush1.msra.mxu0 0.0
    %414 = vmatprep.subr.mxu0 0.0
    %415 = vmatpush1.msra.mxu0 0.0
    %416 = vmatprep.subr.mxu0 0.0
    %417 = vmatpush1.msra.mxu0 0.0
    %418 = vmatprep.subr.mxu0 0.0
    %419 = vmatpush1.msra.mxu0 0.0
    %420 = vmatprep.subr.mxu0 0.0
    %421 = vmatpush1.msra.mxu0 0.0
    %422 = vmatprep.subr.mxu0 0.0
    %423 = vmatpush1.msra.mxu0 0.0
    %424 = vmatprep.subr.mxu0 0.0
    %425 = vmatpush1.msra.mxu0 0.0
    %426 = vmatprep.subr.mxu0 0.0
    %427 = vmatpush1.msra.mxu0 0.0
    %428 = vmatprep.subr.mxu0 0.0
    %429 = vmatpush1.msra.mxu0 0.0
    %430 = vmatprep.subr.mxu0 0.0
    %431 = vmatpush1.msra.mxu0 0.0
    %432 = vmatprep.subr.mxu0 0.0
    %433 = vmatpush1.msra.mxu0 0.0
    %434 = vmatprep.subr.mxu0 0.0
    %435 = vmatpush1.msra.mxu0 0.0
    %436 = vmatprep.subr.mxu0 0.0
    %437 = vmatpush1.msra.mxu0 %v404
    %438 = vmatprep.subr.mxu0 0.0
    %439 = vmatpush1.msra.mxu0 %v403
    %440 = vmatprep.subr.mxu0 0.0
    %441 = vmatpush2.msra.mxu0 0.0
    %442 = vmatprep.subr.mxu0 0.0
    %443 = vmatpush2.msra.mxu0 0.0
    %444 = vmatprep.subr.mxu0 0.0
    %445 = vmatpush2.msra.mxu0 0.0
    %446 = vmatprep.subr.mxu0 0.0
    %447 = vmatpush2.msra.mxu0 0.0
    %448 = vmatprep.subr.mxu0 0.0
    %449 = vmatpush2.msra.mxu0 0.0
    %450 = vmatprep.subr.mxu0 0.0
    %451 = vmatpush2.msra.mxu0 0.0
    %452 = vmatprep.subr.mxu0 0.0
    %453 = vmatpush2.msra.mxu0 0.0
    %454 = vmatprep.subr.mxu0 0.0
    %455 = vmatpush2.msra.mxu0 0.0
    %456 = vmatprep.subr.mxu0 0.0
    %457 = vmatpush2.msra.mxu0 0.0
    %458 = vmatprep.subr.mxu0 0.0
    %459 = vmatpush2.msra.mxu0 0.0
    %460 = vmatprep.subr.mxu0 0.0
    %461 = vmatpush2.msra.mxu0 0.0
    %462 = vmatprep.subr.mxu0 0.0
    %463 = vmatpush2.msra.mxu0 0.0
    %464 = vmatprep.subr.mxu0 0.0
    %465 = vmatpush2.msra.mxu0 0.0
    %466 = vmatprep.subr.mxu0 0.0
    %467 = vmatpush2.msra.mxu0 0.0
    %468 = vmatprep.subr.mxu0 0.0
    %469 = vmatpush2.msra.mxu0 0.0
    %470 = vmatprep.subr.mxu0 0.0
    %471 = vmatpush2.msra.mxu0 0.0
    %472 = vmatprep.mubr.f32.mxu0 0.0
    %473 = vmatmul.mubr.f32.gmra.mxu0 %v406
    %v474 = vpop.f32.mrf.mxu0
    %v475 = vadd.f32 0.0, %v474
    %v476 = vpop.f32.mrf.mxu0
    %477 = vdwg.mxu0
    %478 = vst [vmem:[#allocation2] sm:$0xf] %v475
    // Predicated region
    $region18: #{tpu_custom_call.1} parent=1 // pred_check
      _
    $region19: #{tpu_custom_call.1} parent=1 // pred_check_branch
      %480 = sbr.rel (0) target = $region21
    $region20: #{tpu_custom_call.1} parent=1 // pred_region
      %s482 = ssub.s32 64, 64
      %483 = vsyncadd [#allocation3], %s482
      %s485 = sshll.u32 [#allocation2], 4
      %s486 = int_to_ptr.vmem [resolvable:$true] %s485
      %488 = dma.vmem_to_hbm [thread:$0]  %s486, 64, %s4, [#allocation3]
    $region21: #{tpu_custom_call.1} parent=1 // pred_fallthru
      _
    // Predicated region
    $region22: #{tpu_custom_call.1} parent=1 // pred_check
      _
    $region23: #{tpu_custom_call.1} parent=1 // pred_check_branch
      %490 = sbr.rel (0) target = $region25
    $region24: #{tpu_custom_call.1} parent=1 // pred_region
      %491 = dma.done [#allocation3], 64
    $region25: #{tpu_custom_call.1} parent=1 // pred_fallthru
      _
    %492 = vsyncpa [#allocation3], 1

</llo_original>
